<compile_context>
chip_gen: v5e
topology: v5e:2x2
jax: 0.10.0
libtpu: 0.0.40
codegen_flags: <defaults>
</compile_context>

<pallas_src>
import functools

import jax
import jax.numpy as jnp
from jax import lax
from jax.experimental import pallas as pl
from jax.experimental.pallas import tpu as pltpu

CLAMP_MAX = 127.0
CLAMP_MIN = 0.0
SHIFT = 6
INV_SHIFT_SCALE = 1.0 / (1 << SHIFT)  # 1/64, exact power of two

IN_DIM = 512
HID = 32


def _round_up(n, m):
    return ((n + m - 1) // m) * m


def _shift_and_clamp_f32(x):
    # torch: x.to(int32) >> 6, clamp [0, 127], back to float32.
    # x is post-ReLU (non-negative), so truncation == floor, the arithmetic
    # shift is floor-division by 64, and *1/64 is an exact exponent shift
    # -> bit-exact float rewrite.  Lower clamp is redundant (floor >= 0).
    return jnp.minimum(jnp.floor(x * INV_SHIFT_SCALE), CLAMP_MAX)


def nnue_kernel(x_ref, w1_ref, b1_ref, w2_ref, b2_ref, wo_ref, bo_ref, o_ref):
    # x tile: [TB, 512] f32.  Tail rows of a ragged last block may contain
    # undefined data; everything below is row-wise and those output elements
    # are discarded by the wrapper slice.
    x = x_ref[...]

    # layer1: [TB,512] @ [512,32] + [1,32]
    h1 = jnp.dot(x, w1_ref[...], preferred_element_type=jnp.float32) + b1_ref[...]
    h1 = jnp.maximum(h1, 0.0)
    h1 = _shift_and_clamp_f32(h1)

    # layer2: [TB,32] @ [32,32] + [1,32]
    h2 = jnp.dot(h1, w2_ref[...], preferred_element_type=jnp.float32) + b2_ref[...]
    h2 = jnp.maximum(h2, 0.0)
    h2 = _shift_and_clamp_f32(h2)

    # output layer, lane-dense orientation:
    #   (1,32) . (TB,32)^T -> (1, TB), + bias (1,1)
    out = lax.dot_general(
        wo_ref[...], h2,
        dimension_numbers=(((1,), (1,)), ((), ())),
        preferred_element_type=jnp.float32,
    ) + bo_ref[...]
    o_ref[...] = out.astype(o_ref.dtype)


@functools.partial(jax.jit, static_argnames=("block_b",))
def nnue_forward(x, w1, b1, w2, b2, w_out, b_out, *, block_b=2048):
    """x: [B, 512] f32; weights are PyTorch-style (out_features, in_features)."""
    B = x.shape[0]
    assert x.shape[1] == IN_DIM

    # ---- batch-tile selection ----
    # * TB always a multiple of 128 (lane dim of the (1, TB) output block).
    # * Multi-step grids use TB as a multiple of 1024 so every block stays
    #   (8,128)-friendly even though the last x block is ragged.
    # * For B > 1024 force >= 2 grid steps so v7x's two TensorCores both get
    #   work under dimension_semantics=("parallel",).
    block_b = max(1024, _round_up(block_b, 1024))
    if B <= 1024:
        TB = _round_up(max(B, 1), 128)          # single grid step
    else:
        TB = min(block_b, max(1024, _round_up(pl.cdiv(B, 2), 1024)))
    grid_b = pl.cdiv(B, TB)                     # no jnp.pad of x

    # Right-multiply layout; biases / output row as 2-D for TPU layout.
    w1_t = w1.T                      # [512, 32]
    w2_t = w2.T                      # [32, 32]
    wo_r = w_out.reshape(1, HID)     # [1, 32]  (torch layout is already (1,32))
    b1_r = b1.reshape(1, HID)
    b2_r = b2.reshape(1, HID)
    bo_r = b_out.reshape(1, 1)

    out_flat = pl.pallas_call(
        nnue_kernel,
        # Lane-dense output: row-major-identical to (grid_b*TB, 1).
        out_shape=jax.ShapeDtypeStruct((1, grid_b * TB), jnp.float32),
        grid_spec=pltpu.PrefetchScalarGridSpec(
            num_scalar_prefetch=0,
            grid=(grid_b,),
            in_specs=[
                # Streamed input: new block every grid step (double-buffered).
                pl.BlockSpec((TB, IN_DIM), lambda i: (i, 0)),
                # Weights/biases: constant index_map -> DMA'd once, resident.
                pl.BlockSpec((IN_DIM, HID), lambda i: (0, 0)),
                pl.BlockSpec((1, HID), lambda i: (0, 0)),
                pl.BlockSpec((HID, HID), lambda i: (0, 0)),
                pl.BlockSpec((1, HID), lambda i: (0, 0)),
                pl.BlockSpec((1, HID), lambda i: (0, 0)),
                pl.BlockSpec((1, 1), lambda i: (0, 0)),
            ],
            out_specs=pl.BlockSpec((1, TB), lambda i: (0, i)),
        ),
        compiler_params=pltpu.CompilerParams(
            # Batch tiles are independent -> shard across TensorCores (v7x).
            dimension_semantics=("parallel",),
            # Covers x double-buffers (<= 8 MiB at TB=2048) + temps with
            # headroom, valid on v5e (16 MiB scoped default raised) and
            # within v7x's 64 MiB physical VMEM.
            vmem_limit_bytes=32 * 1024 * 1024,
        ),
    )(x, w1_t, b1_r, w2_t, b2_r, wo_r, bo_r)

    # Drop the ragged tail written by the last (padded) block.
    return out_flat.reshape(-1)[:B].reshape(B, 1)


def nnue_reference(x, w1, b1, w2, b2, w_out, b_out):
    """Pure-JAX reference mirroring the PyTorch forward (exact int path)."""
    def sc_int(v):
        vi = v.astype(jnp.int32)
        vi = jnp.right_shift(vi, jnp.int32(SHIFT))
        vi = jnp.clip(vi, 0, 127)
        return vi.astype(jnp.float32)

    h1 = jnp.maximum(x @ w1.T + b1, 0.0)
    h1 = sc_int(h1)
    h2 = jnp.maximum(h1 @ w2.T + b2, 0.0)
    h2 = sc_int(h2)
    return h2 @ w_out.T + b_out


if __name__ == "__main__":
    key = jax.random.PRNGKey(0)
    k_x, k_w1, k_b1, k_w2, k_b2, k_wo, k_bo, k_x2 = jax.random.split(key, 8)

    # Deterministic synthetic "extracted weights" (the real module loads .npy
    # files; here we build them in-script with matching shapes/dtypes).
    # Scales chosen so the >>6 quantization path produces nonzero activations.
    w1 = jax.random.uniform(k_w1, (HID, IN_DIM), jnp.float32, -1.0, 1.0)
    b1 = jax.random.uniform(k_b1, (HID,), jnp.float32, -8.0, 8.0)
    w2 = jax.random.uniform(k_w2, (HID, HID), jnp.float32, -32.0, 32.0)
    b2 = jax.random.uniform(k_b2, (HID,), jnp.float32, -16.0, 16.0)
    w_out = jax.random.uniform(k_wo, (1, HID), jnp.float32, -1.0, 1.0)
    b_out = jax.random.uniform(k_bo, (1,), jnp.float32, -1.0, 1.0)

    # Small-batch check (single grid step, ragged block smaller than the tile).
    B = 8
    x = jax.random.uniform(k_x, (B, IN_DIM), jnp.float32, 0.0, 4.0)
    out = jax.block_until_ready(nnue_forward(x, w1, b1, w2, b2, w_out, b_out))
    ref = nnue_reference(x, w1, b1, w2, b2, w_out, b_out)
    assert out.shape == (B, 1), out.shape
    assert jnp.allclose(out, ref, atol=1e-3, rtol=1e-4), (out, ref)

    # Multi-tile check: B not divisible by the tile -> exercises the un-padded
    # cdiv grid, the ragged last input block, the lane-dense output slab, and
    # the >=2-step split for the parallel batch axis.
    B2 = 1537
    x2 = jax.random.uniform(k_x2, (B2, IN_DIM), jnp.float32, 0.0, 4.0)
    out2 = jax.block_until_ready(nnue_forward(x2, w1, b1, w2, b2, w_out, b_out))
    ref2 = nnue_reference(x2, w1, b1, w2, b2, w_out, b_out)
    assert out2.shape == (B2, 1), out2.shape
    assert jnp.allclose(out2, ref2, atol=1e-3, rtol=1e-4)

    print("KERNEL_OK")
</pallas_src>

<mosaic_0001>
module attributes {stable_mosaic.version = 11 : i64} {
  func.func @nnue_kernel(%arg0: i32, %arg1: memref<128x512xf32, #tpu.memory_space<vmem>>, %arg2: memref<512x32xf32, #tpu.memory_space<vmem>>, %arg3: memref<1x32xf32, #tpu.memory_space<vmem>>, %arg4: memref<32x32xf32, #tpu.memory_space<vmem>>, %arg5: memref<1x32xf32, #tpu.memory_space<vmem>>, %arg6: memref<1x32xf32, #tpu.memory_space<vmem>>, %arg7: memref<1x1xf32, #tpu.memory_space<vmem>>, %arg8: memref<1x128xf32, #tpu.memory_space<vmem>>) attributes {dimension_semantics = [#tpu.dimension_semantics<parallel>], iteration_bounds = array<i64: 1>, scalar_prefetch = 0 : i64, scratch_operands = 0 : i64, tpu.core_type = #tpu.core_type<tc>, window_params = [{transform_indices = @transform_0, window_bounds = array<i64: 128, 512>}, {pipeline_mode = #tpu.pipeline_mode<synchronous>, transform_indices = @transform_1, window_bounds = array<i64: 512, 32>}, {pipeline_mode = #tpu.pipeline_mode<synchronous>, transform_indices = @transform_2, window_bounds = array<i64: 1, 32>}, {pipeline_mode = #tpu.pipeline_mode<synchronous>, transform_indices = @transform_3, window_bounds = array<i64: 32, 32>}, {pipeline_mode = #tpu.pipeline_mode<synchronous>, transform_indices = @transform_4, window_bounds = array<i64: 1, 32>}, {pipeline_mode = #tpu.pipeline_mode<synchronous>, transform_indices = @transform_5, window_bounds = array<i64: 1, 32>}, {pipeline_mode = #tpu.pipeline_mode<synchronous>, transform_indices = @transform_6, window_bounds = array<i64: 1, 1>}, {transform_indices = @transform_7, window_bounds = array<i64: 1, 128>}]} {
    %c0 = arith.constant 0 : index
    %c0_0 = arith.constant 0 : index
    %0 = vector.load %arg1[%c0, %c0_0] : memref<128x512xf32, #tpu.memory_space<vmem>>, vector<128x512xf32>
    %c0_1 = arith.constant 0 : index
    %c0_2 = arith.constant 0 : index
    %1 = vector.load %arg2[%c0_1, %c0_2] : memref<512x32xf32, #tpu.memory_space<vmem>>, vector<512x32xf32>
    %cst = arith.constant dense<0.000000e+00> : vector<128x32xf32>
    %2 = tpu.matmul %0, %1, %cst {dimension_numbers = #tpu.dot_dimension_numbers<[1], [0], [0], [1], [0, 0, 1, 1], [], []>} : vector<128x512xf32>, vector<512x32xf32>, vector<128x32xf32> -> vector<128x32xf32>
    %c0_3 = arith.constant 0 : index
    %c0_4 = arith.constant 0 : index
    %3 = vector.load %arg3[%c0_3, %c0_4] : memref<1x32xf32, #tpu.memory_space<vmem>>, vector<1x32xf32>
    %4 = vector.broadcast %3 : vector<1x32xf32> to vector<128x32xf32>
    %5 = arith.addf %2, %4 : vector<128x32xf32>
    %cst_5 = arith.constant 0.000000e+00 : f32
    %6 = vector.broadcast %cst_5 : f32 to vector<128x32xf32>
    %7 = arith.maximumf %5, %6 : vector<128x32xf32>
    %cst_6 = arith.constant 1.562500e-02 : f32
    %8 = vector.broadcast %cst_6 : f32 to vector<128x32xf32>
    %9 = arith.mulf %7, %8 : vector<128x32xf32>
    %10 = math.floor %9 : vector<128x32xf32>
    %cst_7 = arith.constant 1.270000e+02 : f32
    %11 = vector.broadcast %cst_7 : f32 to vector<128x32xf32>
    %12 = arith.minimumf %10, %11 : vector<128x32xf32>
    %c0_8 = arith.constant 0 : index
    %c0_9 = arith.constant 0 : index
    %13 = vector.load %arg4[%c0_8, %c0_9] : memref<32x32xf32, #tpu.memory_space<vmem>>, vector<32x32xf32>
    %cst_10 = arith.constant dense<0.000000e+00> : vector<128x32xf32>
    %14 = tpu.matmul %12, %13, %cst_10 {dimension_numbers = #tpu.dot_dimension_numbers<[1], [0], [0], [1], [0, 0, 1, 1], [], []>} : vector<128x32xf32>, vector<32x32xf32>, vector<128x32xf32> -> vector<128x32xf32>
    %c0_11 = arith.constant 0 : index
    %c0_12 = arith.constant 0 : index
    %15 = vector.load %arg5[%c0_11, %c0_12] : memref<1x32xf32, #tpu.memory_space<vmem>>, vector<1x32xf32>
    %16 = vector.broadcast %15 : vector<1x32xf32> to vector<128x32xf32>
    %17 = arith.addf %14, %16 : vector<128x32xf32>
    %cst_13 = arith.constant 0.000000e+00 : f32
    %18 = vector.broadcast %cst_13 : f32 to vector<128x32xf32>
    %19 = arith.maximumf %17, %18 : vector<128x32xf32>
    %cst_14 = arith.constant 1.562500e-02 : f32
    %20 = vector.broadcast %cst_14 : f32 to vector<128x32xf32>
    %21 = arith.mulf %19, %20 : vector<128x32xf32>
    %22 = math.floor %21 : vector<128x32xf32>
    %cst_15 = arith.constant 1.270000e+02 : f32
    %23 = vector.broadcast %cst_15 : f32 to vector<128x32xf32>
    %24 = arith.minimumf %22, %23 : vector<128x32xf32>
    %c0_16 = arith.constant 0 : index
    %c0_17 = arith.constant 0 : index
    %25 = vector.load %arg6[%c0_16, %c0_17] : memref<1x32xf32, #tpu.memory_space<vmem>>, vector<1x32xf32>
    %cst_18 = arith.constant dense<0.000000e+00> : vector<1x128xf32>
    %26 = tpu.matmul %25, %24, %cst_18 {dimension_numbers = #tpu.dot_dimension_numbers<[1], [1], [0], [0], [0, 0, 1, 0], [], []>} : vector<1x32xf32>, vector<128x32xf32>, vector<1x128xf32> -> vector<1x128xf32>
    %c0_19 = arith.constant 0 : index
    %c0_20 = arith.constant 0 : index
    %27 = vector.load %arg7[%c0_19, %c0_20] : memref<1x1xf32, #tpu.memory_space<vmem>>, vector<1x1xf32>
    %28 = vector.broadcast %27 : vector<1x1xf32> to vector<1x128xf32>
    %29 = arith.addf %26, %28 : vector<1x128xf32>
    %c0_21 = arith.constant 0 : index
    %c0_22 = arith.constant 0 : index
    %30 = vector.load %arg8[%c0_21, %c0_22] : memref<1x128xf32, #tpu.memory_space<vmem>>, vector<1x128xf32>
    tpu.vector_store %arg8[%c0_21, %c0_22], %29 {strides = array<i32>} : memref<1x128xf32, #tpu.memory_space<vmem>>, vector<1x128xf32>,
    return
  }
  func.func @transform_0(%arg0: i32) -> (i32, i32) {
    %c0_i32 = arith.constant 0 : i32
    %c0_i32_0 = arith.constant 0 : i32
    return %arg0, %c0_i32 : i32, i32
  }
  func.func @transform_1(%arg0: i32) -> (i32, i32) {
    %c0_i32 = arith.constant 0 : i32
    %c0_i32_0 = arith.constant 0 : i32
    %c0_i32_1 = arith.constant 0 : i32
    return %c0_i32, %c0_i32_0 : i32, i32
  }
  func.func @transform_2(%arg0: i32) -> (i32, i32) {
    %c0_i32 = arith.constant 0 : i32
    %c0_i32_0 = arith.constant 0 : i32
    %c0_i32_1 = arith.constant 0 : i32
    return %c0_i32, %c0_i32_0 : i32, i32
  }
  func.func @transform_3(%arg0: i32) -> (i32, i32) {
    %c0_i32 = arith.constant 0 : i32
    %c0_i32_0 = arith.constant 0 : i32
    %c0_i32_1 = arith.constant 0 : i32
    return %c0_i32, %c0_i32_0 : i32, i32
  }
  func.func @transform_4(%arg0: i32) -> (i32, i32) {
    %c0_i32 = arith.constant 0 : i32
    %c0_i32_0 = arith.constant 0 : i32
    %c0_i32_1 = arith.constant 0 : i32
    return %c0_i32, %c0_i32_0 : i32, i32
  }
  func.func @transform_5(%arg0: i32) -> (i32, i32) {
    %c0_i32 = arith.constant 0 : i32
    %c0_i32_0 = arith.constant 0 : i32
    %c0_i32_1 = arith.constant 0 : i32
    return %c0_i32, %c0_i32_0 : i32, i32
  }
  func.func @transform_6(%arg0: i32) -> (i32, i32) {
    %c0_i32 = arith.constant 0 : i32
    %c0_i32_0 = arith.constant 0 : i32
    %c0_i32_1 = arith.constant 0 : i32
    return %c0_i32, %c0_i32_0 : i32, i32
  }
  func.func @transform_7(%arg0: i32) -> (i32, i32) {
    %c0_i32 = arith.constant 0 : i32
    %c0_i32_0 = arith.constant 0 : i32
    return %c0_i32, %arg0 : i32, i32
  }
}

</mosaic_0001>

<llo_original>
// kernel: nnue_forward.1
$region0: #{nnue_forward.1}
  #allocation0 [shape = 'u32[]', space=smem, size = 0x4, offset = 0x4, fixed_abs, tag = 'smem constant byte address 0x4 - core index']
  #allocation1 [shape = 'u32[72,128]{1,0:T(1,128)}', space=vmem, size = 0x9000, scoped, tag = 'internal scratch']
  #allocation2 [shape = 'f32[1,1]{1,0:T(1,128)S(1)}', space=vmem, size = 0x200, scoped, tag = 'scoped memory for nnue_forward.1']
  %s0 = inlined_call_operand.vmem [shape: f32[8,512], index: 0, kind: input, shape index: {}]
  %s1 = inlined_call_operand.vmem [shape: f32[512,32], index: 1, kind: input, shape index: {}]
  %s2 = inlined_call_operand.vmem [shape: f32[1,32], index: 2, kind: input, shape index: {}]
  %s3 = inlined_call_operand.vmem [shape: f32[32,32], index: 3, kind: input, shape index: {}]
  %s4 = inlined_call_operand.vmem [shape: f32[1,32], index: 4, kind: input, shape index: {}]
  %s5 = inlined_call_operand.vmem [shape: f32[1,32], index: 5, kind: input, shape index: {}]
  %s6 = inlined_call_operand.<no memory space> [shape: f32[1,1], index: 6, kind: input, shape index: {}]
  %s7 = inlined_call_operand.vmem [shape: f32[1,128], index: 7, kind: output, shape index: {}]
  %s8 = sld [smem:[#allocation0]]
  $region38: #{nnue_forward.1} parent=0
    _
  %s10 = ssub.s32 1, %s8
  %s11 = scalar_select 0, %s10, %s8
  %v12 = vstv %s6
  %13 = vst [vmem:[#allocation2] sm:$0x1] %v12
  // Predicated region
  $region2: #{nnue_forward.1} parent=0 // pred_check
    _
  $region3: #{nnue_forward.1} parent=0 // pred_check_branch
    %15 = sbr.rel (0) target = $region5
  $region4: #{nnue_forward.1} parent=0 // pred_region
    _
  $region5: #{nnue_forward.1} parent=0 // pred_fallthru
    _
  // Predicated region
  $region6: #{nnue_forward.1} parent=0 // pred_check
    _
  $region7: #{nnue_forward.1} parent=0 // pred_check_branch
    %17 = sbr.rel (0) target = $region9
  $region8: #{nnue_forward.1} parent=0 // pred_region
    _
  $region9: #{nnue_forward.1} parent=0 // pred_fallthru
    _
  // Predicated region
  $region10: #{nnue_forward.1} parent=0 // pred_check
    _
  $region11: #{nnue_forward.1} parent=0 // pred_check_branch
    %19 = sbr.rel (0) target = $region13
  $region12: #{nnue_forward.1} parent=0 // pred_region
    _
  $region13: #{nnue_forward.1} parent=0 // pred_fallthru
    _
  // Predicated region
  $region14: #{nnue_forward.1} parent=0 // pred_check
    _
  $region15: #{nnue_forward.1} parent=0 // pred_check_branch
    %21 = sbr.rel (0) target = $region17
  $region16: #{nnue_forward.1} parent=0 // pred_region
    _
  $region17: #{nnue_forward.1} parent=0 // pred_fallthru
    _
  // Predicated region
  $region18: #{nnue_forward.1} parent=0 // pred_check
    _
  $region19: #{nnue_forward.1} parent=0 // pred_check_branch
    %23 = sbr.rel (0) target = $region21
  $region20: #{nnue_forward.1} parent=0 // pred_region
    _
  $region21: #{nnue_forward.1} parent=0 // pred_fallthru
    _
  // Predicated region
  $region22: #{nnue_forward.1} parent=0 // pred_check
    _
  $region23: #{nnue_forward.1} parent=0 // pred_check_branch
    %25 = sbr.rel (0) target = $region25
  $region24: #{nnue_forward.1} parent=0 // pred_region
    _
  $region25: #{nnue_forward.1} parent=0 // pred_fallthru
    _
  // Predicated region
  $region26: #{nnue_forward.1} parent=0 // pred_check
    _
  $region27: #{nnue_forward.1} parent=0 // pred_check_branch
    %27 = sbr.rel (0) target = $region29
  $region28: #{nnue_forward.1} parent=0 // pred_region
    _
  $region29: #{nnue_forward.1} parent=0 // pred_fallthru
    _
  %v28 = vld [vmem:[%s0] sm:$0xff]
  %v29 = vld [vmem:[%s0 + $0x8] sm:$0xff]
  %v30 = vld [vmem:[%s0 + $0x10] sm:$0xff]
  %v31 = vld [vmem:[%s0 + $0x18] sm:$0xff]
  %v32 = vld [vmem:[%s0 + $0x20] sm:$0xff]
  %v33 = vld [vmem:[%s0 + $0x28] sm:$0xff]
  %v34 = vld [vmem:[%s0 + $0x30] sm:$0xff]
  %v35 = vld [vmem:[%s0 + $0x38] sm:$0xff]
  %v36 = vld [vmem:[%s0 + $0x40] sm:$0xff]
  %v37 = vld [vmem:[%s0 + $0x48] sm:$0xff]
  %v38 = vld [vmem:[%s0 + $0x50] sm:$0xff]
  %v39 = vld [vmem:[%s0 + $0x58] sm:$0xff]
  %v40 = vld [vmem:[%s0 + $0x60] sm:$0xff]
  %v41 = vld [vmem:[%s0 + $0x68] sm:$0xff]
  %v42 = vld [vmem:[%s0 + $0x70] sm:$0xff]
  %v43 = vld [vmem:[%s0 + $0x78] sm:$0xff]
  %v44 = vld [vmem:[%s0 + $0x80] sm:$0xff]
  %v45 = vld [vmem:[%s0 + $0x88] sm:$0xff]
  %v46 = vld [vmem:[%s0 + $0x90] sm:$0xff]
  %v47 = vld [vmem:[%s0 + $0x98] sm:$0xff]
  %v48 = vld [vmem:[%s0 + $0xa0] sm:$0xff]
  %v49 = vld [vmem:[%s0 + $0xa8] sm:$0xff]
  %v50 = vld [vmem:[%s0 + $0xb0] sm:$0xff]
  %v51 = vld [vmem:[%s0 + $0xb8] sm:$0xff]
  %v52 = vld [vmem:[%s0 + $0xc0] sm:$0xff]
  %v53 = vld [vmem:[%s0 + $0xc8] sm:$0xff]
  %v54 = vld [vmem:[%s0 + $0xd0] sm:$0xff]
  %v55 = vld [vmem:[%s0 + $0xd8] sm:$0xff]
  %v56 = vld [vmem:[%s0 + $0xe0] sm:$0xff]
  %v57 = vld [vmem:[%s0 + $0xe8] sm:$0xff]
  %v58 = vld [vmem:[%s0 + $0xf0] sm:$0xff]
  %v59 = vld [vmem:[%s0 + $0xf8] sm:$0xff]
  %v60 = vld [vmem:[%s0 + $0x100] sm:$0xff]
  %v61 = vld [vmem:[%s0 + $0x108] sm:$0xff]
  %v62 = vld [vmem:[%s0 + $0x110] sm:$0xff]
  %v63 = vld [vmem:[%s0 + $0x118] sm:$0xff]
  %v64 = vld [vmem:[%s0 + $0x120] sm:$0xff]
  %v65 = vld [vmem:[%s0 + $0x128] sm:$0xff]
  %v66 = vld [vmem:[%s0 + $0x130] sm:$0xff]
  %v67 = vld [vmem:[%s0 + $0x138] sm:$0xff]
  %v68 = vld [vmem:[%s0 + $0x140] sm:$0xff]
  %v69 = vld [vmem:[%s0 + $0x148] sm:$0xff]
  %v70 = vld [vmem:[%s0 + $0x150] sm:$0xff]
  %v71 = vld [vmem:[%s0 + $0x158] sm:$0xff]
  %v72 = vld [vmem:[%s0 + $0x160] sm:$0xff]
  %v73 = vld [vmem:[%s0 + $0x168] sm:$0xff]
  %v74 = vld [vmem:[%s0 + $0x170] sm:$0xff]
  %v75 = vld [vmem:[%s0 + $0x178] sm:$0xff]
  %v76 = vld [vmem:[%s0 + $0x180] sm:$0xff]
  %v77 = vld [vmem:[%s0 + $0x188] sm:$0xff]
  %v78 = vld [vmem:[%s0 + $0x190] sm:$0xff]
  %v79 = vld [vmem:[%s0 + $0x198] sm:$0xff]
  %v80 = vld [vmem:[%s0 + $0x1a0] sm:$0xff]
  %v81 = vld [vmem:[%s0 + $0x1a8] sm:$0xff]
  %v82 = vld [vmem:[%s0 + $0x1b0] sm:$0xff]
  %v83 = vld [vmem:[%s0 + $0x1b8] sm:$0xff]
  %v84 = vld [vmem:[%s0 + $0x1c0] sm:$0xff]
  %v85 = vld [vmem:[%s0 + $0x1c8] sm:$0xff]
  %v86 = vld [vmem:[%s0 + $0x1d0] sm:$0xff]
  %v87 = vld [vmem:[%s0 + $0x1d8] sm:$0xff]
  %v88 = vld [vmem:[%s0 + $0x1e0] sm:$0xff]
  %v89 = vld [vmem:[%s0 + $0x1e8] sm:$0xff]
  %v90 = vld [vmem:[%s0 + $0x1f0] sm:$0xff]
  %v91 = vld [vmem:[%s0 + $0x1f8] sm:$0xff]
  %v92 = vld [vmem:[%s1] sm:$0xff]
  %v93 = vld [vmem:[%s1 + $0x8] sm:$0xff]
  %v94 = vld [vmem:[%s1 + $0x10] sm:$0xff]
  %v95 = vld [vmem:[%s1 + $0x18] sm:$0xff]
  %v96 = vld [vmem:[%s1 + $0x20] sm:$0xff]
  %v97 = vld [vmem:[%s1 + $0x28] sm:$0xff]
  %v98 = vld [vmem:[%s1 + $0x30] sm:$0xff]
  %v99 = vld [vmem:[%s1 + $0x38] sm:$0xff]
  %v100 = vld [vmem:[%s1 + $0x40] sm:$0xff]
  %v101 = vld [vmem:[%s1 + $0x48] sm:$0xff]
  %v102 = vld [vmem:[%s1 + $0x50] sm:$0xff]
  %v103 = vld [vmem:[%s1 + $0x58] sm:$0xff]
  %v104 = vld [vmem:[%s1 + $0x60] sm:$0xff]
  %v105 = vld [vmem:[%s1 + $0x68] sm:$0xff]
  %v106 = vld [vmem:[%s1 + $0x70] sm:$0xff]
  %v107 = vld [vmem:[%s1 + $0x78] sm:$0xff]
  %v108 = vld [vmem:[%s1 + $0x80] sm:$0xff]
  %v109 = vld [vmem:[%s1 + $0x88] sm:$0xff]
  %v110 = vld [vmem:[%s1 + $0x90] sm:$0xff]
  %v111 = vld [vmem:[%s1 + $0x98] sm:$0xff]
  %v112 = vld [vmem:[%s1 + $0xa0] sm:$0xff]
  %v113 = vld [vmem:[%s1 + $0xa8] sm:$0xff]
  %v114 = vld [vmem:[%s1 + $0xb0] sm:$0xff]
  %v115 = vld [vmem:[%s1 + $0xb8] sm:$0xff]
  %v116 = vld [vmem:[%s1 + $0xc0] sm:$0xff]
  %v117 = vld [vmem:[%s1 + $0xc8] sm:$0xff]
  %v118 = vld [vmem:[%s1 + $0xd0] sm:$0xff]
  %v119 = vld [vmem:[%s1 + $0xd8] sm:$0xff]
  %v120 = vld [vmem:[%s1 + $0xe0] sm:$0xff]
  %v121 = vld [vmem:[%s1 + $0xe8] sm:$0xff]
  %v122 = vld [vmem:[%s1 + $0xf0] sm:$0xff]
  %v123 = vld [vmem:[%s1 + $0xf8] sm:$0xff]
  %v124 = vld [vmem:[%s1 + $0x100] sm:$0xff]
  %v125 = vld [vmem:[%s1 + $0x108] sm:$0xff]
  %v126 = vld [vmem:[%s1 + $0x110] sm:$0xff]
  %v127 = vld [vmem:[%s1 + $0x118] sm:$0xff]
  %v128 = vld [vmem:[%s1 + $0x120] sm:$0xff]
  %v129 = vld [vmem:[%s1 + $0x128] sm:$0xff]
  %v130 = vld [vmem:[%s1 + $0x130] sm:$0xff]
  %v131 = vld [vmem:[%s1 + $0x138] sm:$0xff]
  %v132 = vld [vmem:[%s1 + $0x140] sm:$0xff]
  %v133 = vld [vmem:[%s1 + $0x148] sm:$0xff]
  %v134 = vld [vmem:[%s1 + $0x150] sm:$0xff]
  %v135 = vld [vmem:[%s1 + $0x158] sm:$0xff]
  %v136 = vld [vmem:[%s1 + $0x160] sm:$0xff]
  %v137 = vld [vmem:[%s1 + $0x168] sm:$0xff]
  %v138 = vld [vmem:[%s1 + $0x170] sm:$0xff]
  %v139 = vld [vmem:[%s1 + $0x178] sm:$0xff]
  %v140 = vld [vmem:[%s1 + $0x180] sm:$0xff]
  %v141 = vld [vmem:[%s1 + $0x188] sm:$0xff]
  %v142 = vld [vmem:[%s1 + $0x190] sm:$0xff]
  %v143 = vld [vmem:[%s1 + $0x198] sm:$0xff]
  %v144 = vld [vmem:[%s1 + $0x1a0] sm:$0xff]
  %v145 = vld [vmem:[%s1 + $0x1a8] sm:$0xff]
  %v146 = vld [vmem:[%s1 + $0x1b0] sm:$0xff]
  %v147 = vld [vmem:[%s1 + $0x1b8] sm:$0xff]
  %v148 = vld [vmem:[%s1 + $0x1c0] sm:$0xff]
  %v149 = vld [vmem:[%s1 + $0x1c8] sm:$0xff]
  %v150 = vld [vmem:[%s1 + $0x1d0] sm:$0xff]
  %v151 = vld [vmem:[%s1 + $0x1d8] sm:$0xff]
  %v152 = vld [vmem:[%s1 + $0x1e0] sm:$0xff]
  %v153 = vld [vmem:[%s1 + $0x1e8] sm:$0xff]
  %v154 = vld [vmem:[%s1 + $0x1f0] sm:$0xff]
  %v155 = vld [vmem:[%s1 + $0x1f8] sm:$0xff]
  %v156 = vld [vmem:[%s2] sm:$0x1]
  %v158 = vperm.slane %v156, 0
  %160 = vmatpush.msra.mxu0 %v107
  %161 = vmatpush.msra.mxu0 %v106
  %162 = vmatpush.msra.mxu0 %v105
  %163 = vmatpush.msra.mxu0 %v104
  %164 = vmatpush.msra.mxu0 %v103
  %165 = vmatpush.msra.mxu0 %v102
  %166 = vmatpush.msra.mxu0 %v101
  %167 = vmatpush.msra.mxu0 %v100
  %168 = vmatpush.msra.mxu0 %v99
  %169 = vmatpush.msra.mxu0 %v98
  %170 = vmatpush.msra.mxu0 %v97
  %171 = vmatpush.msra.mxu0 %v96
  %172 = vmatpush.msra.mxu0 %v95
  %173 = vmatpush.msra.mxu0 %v94
  %174 = vmatpush.msra.mxu0 %v93
  %175 = vmatpush.msra.mxu0 %v92
  %176 = vmatmul.f32.gmra.mxu0 %v28
  %v177 = vpop.f32.mrf.mxu0
  %v178 = vadd.f32 %v158, %v177
  %179 = vmatmul.f32.gmra.mxu0 %v32
  %v180 = vpop.f32.mrf.mxu0
  %v181 = vadd.f32 %v158, %v180
  %182 = vmatmul.f32.gmra.mxu0 %v36
  %v183 = vpop.f32.mrf.mxu0
  %v184 = vadd.f32 %v158, %v183
  %185 = vmatmul.f32.gmra.mxu0 %v40
  %v186 = vpop.f32.mrf.mxu0
  %v187 = vadd.f32 %v158, %v186
  %188 = vmatmul.f32.gmra.mxu0 %v44
  %v189 = vpop.f32.mrf.mxu0
  %v190 = vadd.f32 %v158, %v189
  %191 = vmatmul.f32.gmra.mxu0 %v48
  %v192 = vpop.f32.mrf.mxu0
  %v193 = vadd.f32 %v158, %v192
  %194 = vmatmul.f32.gmra.mxu0 %v52
  %v195 = vpop.f32.mrf.mxu0
  %v196 = vadd.f32 %v158, %v195
  %197 = vmatmul.f32.gmra.mxu0 %v56
  %v198 = vpop.f32.mrf.mxu0
  %v199 = vadd.f32 %v158, %v198
  %200 = vmatmul.f32.gmra.mxu0 %v60
  %v201 = vpop.f32.mrf.mxu0
  %v202 = vadd.f32 %v158, %v201
  %203 = vmatmul.f32.gmra.mxu0 %v64
  %v204 = vpop.f32.mrf.mxu0
  %v205 = vadd.f32 %v158, %v204
  %206 = vmatmul.f32.gmra.mxu0 %v68
  %v207 = vpop.f32.mrf.mxu0
  %v208 = vadd.f32 %v158, %v207
  %209 = vmatmul.f32.gmra.mxu0 %v72
  %v210 = vpop.f32.mrf.mxu0
  %v211 = vadd.f32 %v158, %v210
  %212 = vmatmul.f32.gmra.mxu0 %v76
  %v213 = vpop.f32.mrf.mxu0
  %v214 = vadd.f32 %v158, %v213
  %215 = vmatmul.f32.gmra.mxu0 %v80
  %v216 = vpop.f32.mrf.mxu0
  %v217 = vadd.f32 %v158, %v216
  %218 = vmatmul.f32.gmra.mxu0 %v84
  %v219 = vpop.f32.mrf.mxu0
  %v220 = vadd.f32 %v158, %v219
  %221 = vmatmul.f32.gmra.mxu0 %v88
  %v222 = vpop.f32.mrf.mxu0
  %v223 = vadd.f32 %v158, %v222
  %224 = vdwg.mxu0
  %225 = vmatpush.msra.mxu0 %v123
  %226 = vmatpush.msra.mxu0 %v122
  %227 = vmatpush.msra.mxu0 %v121
  %228 = vmatpush.msra.mxu0 %v120
  %229 = vmatpush.msra.mxu0 %v119
  %230 = vmatpush.msra.mxu0 %v118
  %231 = vmatpush.msra.mxu0 %v117
  %232 = vmatpush.msra.mxu0 %v116
  %233 = vmatpush.msra.mxu0 %v115
  %234 = vmatpush.msra.mxu0 %v114
  %235 = vmatpush.msra.mxu0 %v113
  %236 = vmatpush.msra.mxu0 %v112
  %237 = vmatpush.msra.mxu0 %v111
  %238 = vmatpush.msra.mxu0 %v110
  %239 = vmatpush.msra.mxu0 %v109
  %240 = vmatpush.msra.mxu0 %v108
  %241 = vmatmul.f32.gmra.mxu0 %v29
  %v242 = vpop.f32.mrf.mxu0
  %v243 = vadd.f32 %v178, %v242
  %244 = vmatmul.f32.gmra.mxu0 %v33
  %v245 = vpop.f32.mrf.mxu0
  %v246 = vadd.f32 %v181, %v245
  %247 = vmatmul.f32.gmra.mxu0 %v37
  %v248 = vpop.f32.mrf.mxu0
  %v249 = vadd.f32 %v184, %v248
  %250 = vmatmul.f32.gmra.mxu0 %v41
  %v251 = vpop.f32.mrf.mxu0
  %v252 = vadd.f32 %v187, %v251
  %253 = vmatmul.f32.gmra.mxu0 %v45
  %v254 = vpop.f32.mrf.mxu0
  %v255 = vadd.f32 %v190, %v254
  %256 = vmatmul.f32.gmra.mxu0 %v49
  %v257 = vpop.f32.mrf.mxu0
  %v258 = vadd.f32 %v193, %v257
  %259 = vmatmul.f32.gmra.mxu0 %v53
  %v260 = vpop.f32.mrf.mxu0
  %v261 = vadd.f32 %v196, %v260
  %262 = vmatmul.f32.gmra.mxu0 %v57
  %v263 = vpop.f32.mrf.mxu0
  %v264 = vadd.f32 %v199, %v263
  %265 = vmatmul.f32.gmra.mxu0 %v61
  %v266 = vpop.f32.mrf.mxu0
  %v267 = vadd.f32 %v202, %v266
  %268 = vmatmul.f32.gmra.mxu0 %v65
  %v269 = vpop.f32.mrf.mxu0
  %v270 = vadd.f32 %v205, %v269
  %271 = vmatmul.f32.gmra.mxu0 %v69
  %v272 = vpop.f32.mrf.mxu0
  %v273 = vadd.f32 %v208, %v272
  %274 = vmatmul.f32.gmra.mxu0 %v73
  %v275 = vpop.f32.mrf.mxu0
  %v276 = vadd.f32 %v211, %v275
  %277 = vmatmul.f32.gmra.mxu0 %v77
  %v278 = vpop.f32.mrf.mxu0
  %v279 = vadd.f32 %v214, %v278
  %280 = vmatmul.f32.gmra.mxu0 %v81
  %v281 = vpop.f32.mrf.mxu0
  %v282 = vadd.f32 %v217, %v281
  %283 = vmatmul.f32.gmra.mxu0 %v85
  %v284 = vpop.f32.mrf.mxu0
  %v285 = vadd.f32 %v220, %v284
  %286 = vmatmul.f32.gmra.mxu0 %v89
  %v287 = vpop.f32.mrf.mxu0
  %v288 = vadd.f32 %v223, %v287
  %289 = vdwg.mxu0
  %290 = vmatpush.msra.mxu0 %v139
  %291 = vmatpush.msra.mxu0 %v138
  %292 = vmatpush.msra.mxu0 %v137
  %293 = vmatpush.msra.mxu0 %v136
  %294 = vmatpush.msra.mxu0 %v135
  %295 = vmatpush.msra.mxu0 %v134
  %296 = vmatpush.msra.mxu0 %v133
  %297 = vmatpush.msra.mxu0 %v132
  %298 = vmatpush.msra.mxu0 %v131
  %299 = vmatpush.msra.mxu0 %v130
  %300 = vmatpush.msra.mxu0 %v129
  %301 = vmatpush.msra.mxu0 %v128
  %302 = vmatpush.msra.mxu0 %v127
  %303 = vmatpush.msra.mxu0 %v126
  %304 = vmatpush.msra.mxu0 %v125
  %305 = vmatpush.msra.mxu0 %v124
  %306 = vmatmul.f32.gmra.mxu0 %v30
  %v307 = vpop.f32.mrf.mxu0
  %v308 = vadd.f32 %v243, %v307
  %309 = vmatmul.f32.gmra.mxu0 %v34
  %v310 = vpop.f32.mrf.mxu0
  %v311 = vadd.f32 %v246, %v310
  %312 = vmatmul.f32.gmra.mxu0 %v38
  %v313 = vpop.f32.mrf.mxu0
  %v314 = vadd.f32 %v249, %v313
  %315 = vmatmul.f32.gmra.mxu0 %v42
  %v316 = vpop.f32.mrf.mxu0
  %v317 = vadd.f32 %v252, %v316
  %318 = vmatmul.f32.gmra.mxu0 %v46
  %v319 = vpop.f32.mrf.mxu0
  %v320 = vadd.f32 %v255, %v319
  %321 = vmatmul.f32.gmra.mxu0 %v50
  %v322 = vpop.f32.mrf.mxu0
  %v323 = vadd.f32 %v258, %v322
  %324 = vmatmul.f32.gmra.mxu0 %v54
  %v325 = vpop.f32.mrf.mxu0
  %v326 = vadd.f32 %v261, %v325
  %327 = vmatmul.f32.gmra.mxu0 %v58
  %v328 = vpop.f32.mrf.mxu0
  %v329 = vadd.f32 %v264, %v328
  %330 = vmatmul.f32.gmra.mxu0 %v62
  %v331 = vpop.f32.mrf.mxu0
  %v332 = vadd.f32 %v267, %v331
  %333 = vmatmul.f32.gmra.mxu0 %v66
  %v334 = vpop.f32.mrf.mxu0
  %v335 = vadd.f32 %v270, %v334
  %336 = vmatmul.f32.gmra.mxu0 %v70
  %v337 = vpop.f32.mrf.mxu0
  %v338 = vadd.f32 %v273, %v337
  %339 = vmatmul.f32.gmra.mxu0 %v74
  %v340 = vpop.f32.mrf.mxu0
  %v341 = vadd.f32 %v276, %v340
  %342 = vmatmul.f32.gmra.mxu0 %v78
  %v343 = vpop.f32.mrf.mxu0
  %v344 = vadd.f32 %v279, %v343
  %345 = vmatmul.f32.gmra.mxu0 %v82
  %v346 = vpop.f32.mrf.mxu0
  %v347 = vadd.f32 %v282, %v346
  %348 = vmatmul.f32.gmra.mxu0 %v86
  %v349 = vpop.f32.mrf.mxu0
  %v350 = vadd.f32 %v285, %v349
  %351 = vmatmul.f32.gmra.mxu0 %v90
  %v352 = vpop.f32.mrf.mxu0
  %v353 = vadd.f32 %v288, %v352
  %354 = vdwg.mxu0
  %355 = vmatpush.msra.mxu0 %v155
  %356 = vmatpush.msra.mxu0 %v154
  %357 = vmatpush.msra.mxu0 %v153
  %358 = vmatpush.msra.mxu0 %v152
  %359 = vmatpush.msra.mxu0 %v151
  %360 = vmatpush.msra.mxu0 %v150
  %361 = vmatpush.msra.mxu0 %v149
  %362 = vmatpush.msra.mxu0 %v148
  %363 = vmatpush.msra.mxu0 %v147
  %364 = vmatpush.msra.mxu0 %v146
  %365 = vmatpush.msra.mxu0 %v145
  %366 = vmatpush.msra.mxu0 %v144
  %367 = vmatpush.msra.mxu0 %v143
  %368 = vmatpush.msra.mxu0 %v142
  %369 = vmatpush.msra.mxu0 %v141
  %370 = vmatpush.msra.mxu0 %v140
  %371 = vmatmul.f32.gmra.mxu0 %v31
  %v372 = vpop.f32.mrf.mxu0
  %v373 = vadd.f32 %v308, %v372
  %374 = vmatmul.f32.gmra.mxu0 %v35
  %v375 = vpop.f32.mrf.mxu0
  %v376 = vadd.f32 %v311, %v375
  %377 = vmatmul.f32.gmra.mxu0 %v39
  %v378 = vpop.f32.mrf.mxu0
  %v379 = vadd.f32 %v314, %v378
  %380 = vmatmul.f32.gmra.mxu0 %v43
  %v381 = vpop.f32.mrf.mxu0
  %v382 = vadd.f32 %v317, %v381
  %383 = vmatmul.f32.gmra.mxu0 %v47
  %v384 = vpop.f32.mrf.mxu0
  %v385 = vadd.f32 %v320, %v384
  %386 = vmatmul.f32.gmra.mxu0 %v51
  %v387 = vpop.f32.mrf.mxu0
  %v388 = vadd.f32 %v323, %v387
  %389 = vmatmul.f32.gmra.mxu0 %v55
  %v390 = vpop.f32.mrf.mxu0
  %v391 = vadd.f32 %v326, %v390
  %392 = vmatmul.f32.gmra.mxu0 %v59
  %v393 = vpop.f32.mrf.mxu0
  %v394 = vadd.f32 %v329, %v393
  %395 = vmatmul.f32.gmra.mxu0 %v63
  %v396 = vpop.f32.mrf.mxu0
  %v397 = vadd.f32 %v332, %v396
  %398 = vmatmul.f32.gmra.mxu0 %v67
  %v399 = vpop.f32.mrf.mxu0
  %v400 = vadd.f32 %v335, %v399
  %401 = vmatmul.f32.gmra.mxu0 %v71
  %v402 = vpop.f32.mrf.mxu0
  %v403 = vadd.f32 %v338, %v402
  %404 = vmatmul.f32.gmra.mxu0 %v75
  %v405 = vpop.f32.mrf.mxu0
  %v406 = vadd.f32 %v341, %v405
  %407 = vmatmul.f32.gmra.mxu0 %v79
  %v408 = vpop.f32.mrf.mxu0
  %v409 = vadd.f32 %v344, %v408
  %410 = vmatmul.f32.gmra.mxu0 %v83
  %v411 = vpop.f32.mrf.mxu0
  %v412 = vadd.f32 %v347, %v411
  %413 = vmatmul.f32.gmra.mxu0 %v87
  %v414 = vpop.f32.mrf.mxu0
  %v415 = vadd.f32 %v350, %v414
  %416 = vmatmul.f32.gmra.mxu0 %v91
  %v417 = vpop.f32.mrf.mxu0
  %v418 = vadd.f32 %v353, %v417
  %419 = vdwg.mxu0
  %v420 = vmax.f32 %v373, 0.0
  %v421 = vmax.f32 %v376, 0.0
  %v422 = vmax.f32 %v379, 0.0
  %v423 = vmax.f32 %v382, 0.0
  %v424 = vmax.f32 %v385, 0.0
  %v425 = vmax.f32 %v388, 0.0
  %v426 = vmax.f32 %v391, 0.0
  %v427 = vmax.f32 %v394, 0.0
  %v428 = vmax.f32 %v397, 0.0
  %v429 = vmax.f32 %v400, 0.0
  %v430 = vmax.f32 %v403, 0.0
  %v431 = vmax.f32 %v406, 0.0
  %v432 = vmax.f32 %v409, 0.0
  %v433 = vmax.f32 %v412, 0.0
  %v434 = vmax.f32 %v415, 0.0
  %v435 = vmax.f32 %v418, 0.0
  %v436 = vmul.f32 %v420, 0.015625
  %v437 = vmul.f32 %v421, 0.015625
  %v438 = vmul.f32 %v422, 0.015625
  %v439 = vmul.f32 %v423, 0.015625
  %v440 = vmul.f32 %v424, 0.015625
  %v441 = vmul.f32 %v425, 0.015625
  %v442 = vmul.f32 %v426, 0.015625
  %v443 = vmul.f32 %v427, 0.015625
  %v444 = vmul.f32 %v428, 0.015625
  %v445 = vmul.f32 %v429, 0.015625
  %v446 = vmul.f32 %v430, 0.015625
  %v447 = vmul.f32 %v431, 0.015625
  %v448 = vmul.f32 %v432, 0.015625
  %v449 = vmul.f32 %v433, 0.015625
  %v450 = vmul.f32 %v434, 0.015625
  %v451 = vmul.f32 %v435, 0.015625
  %v452 = vfloor.f32 %v436
  %v453 = vfloor.f32 %v437
  %v454 = vfloor.f32 %v438
  %v455 = vfloor.f32 %v439
  %v456 = vfloor.f32 %v440
  %v457 = vfloor.f32 %v441
  %v458 = vfloor.f32 %v442
  %v459 = vfloor.f32 %v443
  %v460 = vfloor.f32 %v444
  %v461 = vfloor.f32 %v445
  %v462 = vfloor.f32 %v446
  %v463 = vfloor.f32 %v447
  %v464 = vfloor.f32 %v448
  %v465 = vfloor.f32 %v449
  %v466 = vfloor.f32 %v450
  %v467 = vfloor.f32 %v451
  %v468 = vmin.f32 %v452, 127.0
  %v469 = vmin.f32 %v453, 127.0
  %v470 = vmin.f32 %v454, 127.0
  %v471 = vmin.f32 %v455, 127.0
  %v472 = vmin.f32 %v456, 127.0
  %v473 = vmin.f32 %v457, 127.0
  %v474 = vmin.f32 %v458, 127.0
  %v475 = vmin.f32 %v459, 127.0
  %v476 = vmin.f32 %v460, 127.0
  %v477 = vmin.f32 %v461, 127.0
  %v478 = vmin.f32 %v462, 127.0
  %v479 = vmin.f32 %v463, 127.0
  %v480 = vmin.f32 %v464, 127.0
  %v481 = vmin.f32 %v465, 127.0
  %v482 = vmin.f32 %v466, 127.0
  %v483 = vmin.f32 %v467, 127.0
  %v484 = vld [vmem:[%s3] sm:$0xff]
  %v485 = vld [vmem:[%s3 + $0x8] sm:$0xff]
  %v486 = vld [vmem:[%s3 + $0x10] sm:$0xff]
  %v487 = vld [vmem:[%s3 + $0x18] sm:$0xff]
  %v488 = vld [vmem:[%s4] sm:$0x1]
  %v490 = vperm.slane %v488, 0
  %vm492 = vcmask 261120
  %v494 = vsel %vm492, %v468, 0
  %v497 = vsel %vm492, %v469, 0
  %v500 = vsel %vm492, %v470, 0
  %v503 = vsel %vm492, %v471, 0
  %v506 = vsel %vm492, %v472, 0
  %v509 = vsel %vm492, %v473, 0
  %v512 = vsel %vm492, %v474, 0
  %v515 = vsel %vm492, %v475, 0
  %v518 = vsel %vm492, %v476, 0
  %v521 = vsel %vm492, %v477, 0
  %v524 = vsel %vm492, %v478, 0
  %v527 = vsel %vm492, %v479, 0
  %v530 = vsel %vm492, %v480, 0
  %v533 = vsel %vm492, %v481, 0
  %v536 = vsel %vm492, %v482, 0
  %v539 = vsel %vm492, %v483, 0
  %541 = vmatpush.msra.mxu0 0.0
  %542 = vmatpush.msra.mxu0 0.0
  %543 = vmatpush.msra.mxu0 0.0
  %544 = vmatpush.msra.mxu0 0.0
  %545 = vmatpush.msra.mxu0 0.0
  %546 = vmatpush.msra.mxu0 0.0
  %547 = vmatpush.msra.mxu0 0.0
  %548 = vmatpush.msra.mxu0 0.0
  %549 = vmatpush.msra.mxu0 0.0
  %550 = vmatpush.msra.mxu0 0.0
  %551 = vmatpush.msra.mxu0 0.0
  %552 = vmatpush.msra.mxu0 0.0
  %553 = vmatpush.msra.mxu0 %v487
  %554 = vmatpush.msra.mxu0 %v486
  %555 = vmatpush.msra.mxu0 %v485
  %556 = vmatpush.msra.mxu0 %v484
  %557 = vmatmul.f32.gmra.mxu0 %v494
  %v558 = vpop.f32.mrf.mxu0
  %v559 = vadd.f32 %v490, %v558
  %560 = vmatmul.f32.gmra.mxu0 %v497
  %v561 = vpop.f32.mrf.mxu0
  %v562 = vadd.f32 %v490, %v561
  %563 = vmatmul.f32.gmra.mxu0 %v500
  %v564 = vpop.f32.mrf.mxu0
  %v565 = vadd.f32 %v490, %v564
  %566 = vmatmul.f32.gmra.mxu0 %v503
  %v567 = vpop.f32.mrf.mxu0
  %v568 = vadd.f32 %v490, %v567
  %569 = vmatmul.f32.gmra.mxu0 %v506
  %v570 = vpop.f32.mrf.mxu0
  %v571 = vadd.f32 %v490, %v570
  %572 = vmatmul.f32.gmra.mxu0 %v509
  %v573 = vpop.f32.mrf.mxu0
  %v574 = vadd.f32 %v490, %v573
  %575 = vmatmul.f32.gmra.mxu0 %v512
  %v576 = vpop.f32.mrf.mxu0
  %v577 = vadd.f32 %v490, %v576
  %578 = vmatmul.f32.gmra.mxu0 %v515
  %v579 = vpop.f32.mrf.mxu0
  %v580 = vadd.f32 %v490, %v579
  %581 = vmatmul.f32.gmra.mxu0 %v518
  %v582 = vpop.f32.mrf.mxu0
  %v583 = vadd.f32 %v490, %v582
  %584 = vmatmul.f32.gmra.mxu0 %v521
  %v585 = vpop.f32.mrf.mxu0
  %v586 = vadd.f32 %v490, %v585
  %587 = vmatmul.f32.gmra.mxu0 %v524
  %v588 = vpop.f32.mrf.mxu0
  %v589 = vadd.f32 %v490, %v588
  %590 = vmatmul.f32.gmra.mxu0 %v527
  %v591 = vpop.f32.mrf.mxu0
  %v592 = vadd.f32 %v490, %v591
  %593 = vmatmul.f32.gmra.mxu0 %v530
  %v594 = vpop.f32.mrf.mxu0
  %v595 = vadd.f32 %v490, %v594
  %596 = vmatmul.f32.gmra.mxu0 %v533
  %v597 = vpop.f32.mrf.mxu0
  %v598 = vadd.f32 %v490, %v597
  %599 = vmatmul.f32.gmra.mxu0 %v536
  %v600 = vpop.f32.mrf.mxu0
  %v601 = vadd.f32 %v490, %v600
  %602 = vmatmul.f32.gmra.mxu0 %v539
  %v603 = vpop.f32.mrf.mxu0
  %v604 = vadd.f32 %v490, %v603
  %605 = vdwg.mxu0
  %v606 = vmax.f32 %v559, 0.0
  %v607 = vmax.f32 %v562, 0.0
  %v608 = vmax.f32 %v565, 0.0
  %v609 = vmax.f32 %v568, 0.0
  %v610 = vmax.f32 %v571, 0.0
  %v611 = vmax.f32 %v574, 0.0
  %v612 = vmax.f32 %v577, 0.0
  %v613 = vmax.f32 %v580, 0.0
  %v614 = vmax.f32 %v583, 0.0
  %v615 = vmax.f32 %v586, 0.0
  %v616 = vmax.f32 %v589, 0.0
  %v617 = vmax.f32 %v592, 0.0
  %v618 = vmax.f32 %v595, 0.0
  %v619 = vmax.f32 %v598, 0.0
  %v620 = vmax.f32 %v601, 0.0
  %v621 = vmax.f32 %v604, 0.0
  %v622 = vmul.f32 %v606, 0.015625
  %v623 = vmul.f32 %v607, 0.015625
  %v624 = vmul.f32 %v608, 0.015625
  %v625 = vmul.f32 %v609, 0.015625
  %v626 = vmul.f32 %v610, 0.015625
  %v627 = vmul.f32 %v611, 0.015625
  %v628 = vmul.f32 %v612, 0.015625
  %v629 = vmul.f32 %v613, 0.015625
  %v630 = vmul.f32 %v614, 0.015625
  %v631 = vmul.f32 %v615, 0.015625
  %v632 = vmul.f32 %v616, 0.015625
  %v633 = vmul.f32 %v617, 0.015625
  %v634 = vmul.f32 %v618, 0.015625
  %v635 = vmul.f32 %v619, 0.015625
  %v636 = vmul.f32 %v620, 0.015625
  %v637 = vmul.f32 %v621, 0.015625
  %v638 = vfloor.f32 %v622
  %v639 = vfloor.f32 %v623
  %v640 = vfloor.f32 %v624
  %v641 = vfloor.f32 %v625
  %v642 = vfloor.f32 %v626
  %v643 = vfloor.f32 %v627
  %v644 = vfloor.f32 %v628
  %v645 = vfloor.f32 %v629
  %v646 = vfloor.f32 %v630
  %v647 = vfloor.f32 %v631
  %v648 = vfloor.f32 %v632
  %v649 = vfloor.f32 %v633
  %v650 = vfloor.f32 %v634
  %v651 = vfloor.f32 %v635
  %v652 = vfloor.f32 %v636
  %v653 = vfloor.f32 %v637
  %v654 = vmin.f32 %v638, 127.0
  %v655 = vmin.f32 %v639, 127.0
  %v656 = vmin.f32 %v640, 127.0
  %v657 = vmin.f32 %v641, 127.0
  %v658 = vmin.f32 %v642, 127.0
  %v659 = vmin.f32 %v643, 127.0
  %v660 = vmin.f32 %v644, 127.0
  %v661 = vmin.f32 %v645, 127.0
  %v662 = vmin.f32 %v646, 127.0
  %v663 = vmin.f32 %v647, 127.0
  %v664 = vmin.f32 %v648, 127.0
  %v665 = vmin.f32 %v649, 127.0
  %v666 = vmin.f32 %v650, 127.0
  %v667 = vmin.f32 %v651, 127.0
  %v668 = vmin.f32 %v652, 127.0
  %v669 = vmin.f32 %v653, 127.0
  %v670 = vld [vmem:[%s5] sm:$0x1]
  %v671 = vld [vmem:[#allocation2] sm:$0x1]
  %673 = vset.pattern.permute.xlu0 0
  %674 = vperm.xlu0 %673, %v671
  %v675 = vpop.permute.xlu0 %674
  %v677 = vperm.slane %v675, 0
  %v679 = vsel %vm492, %v670, 0
  %v682 = vsel %vm492, %v654, 0
  %v685 = vsel %vm492, %v655, 0
  %v688 = vsel %vm492, %v656, 0
  %v691 = vsel %vm492, %v657, 0
  %v694 = vsel %vm492, %v658, 0
  %v697 = vsel %vm492, %v659, 0
  %v700 = vsel %vm492, %v660, 0
  %v703 = vsel %vm492, %v661, 0
  %v706 = vsel %vm492, %v662, 0
  %v709 = vsel %vm492, %v663, 0
  %v712 = vsel %vm492, %v664, 0
  %v715 = vsel %vm492, %v665, 0
  %v718 = vsel %vm492, %v666, 0
  %v721 = vsel %vm492, %v667, 0
  %v724 = vsel %vm492, %v668, 0
  %v727 = vsel %vm492, %v669, 0
  %729 = vmatpush.xpose.msra.mxu0 %v727
  %730 = vmatpush.xpose.msra.mxu0 %v724
  %731 = vmatpush.xpose.msra.mxu0 %v721
  %732 = vmatpush.xpose.msra.mxu0 %v718
  %733 = vmatpush.xpose.msra.mxu0 %v715
  %734 = vmatpush.xpose.msra.mxu0 %v712
  %735 = vmatpush.xpose.msra.mxu0 %v709
  %736 = vmatpush.xpose.msra.mxu0 %v706
  %737 = vmatpush.xpose.msra.mxu0 %v703
  %738 = vmatpush.xpose.msra.mxu0 %v700
  %739 = vmatpush.xpose.msra.mxu0 %v697
  %740 = vmatpush.xpose.msra.mxu0 %v694
  %741 = vmatpush.xpose.msra.mxu0 %v691
  %742 = vmatpush.xpose.msra.mxu0 %v688
  %743 = vmatpush.xpose.msra.mxu0 %v685
  %744 = vmatpush.xpose.msra.mxu0 %v682
  %745 = vmatmul.f32.gmra.mxu0 %v679
  %v746 = vpop.f32.mrf.mxu0
  %v747 = vadd.f32 %v677, %v746
  %748 = vdwg.mxu0
  %749 = vst [vmem:[%s7] sm:$0x1] %v747
  // Predicated region
  $region30: #{nnue_forward.1} parent=0 // pred_check
    _
  $region31: #{nnue_forward.1} parent=0 // pred_check_branch
    %751 = sbr.rel (0) target = $region33
  $region32: #{nnue_forward.1} parent=0 // pred_region
    _
  $region33: #{nnue_forward.1} parent=0 // pred_fallthru
    _
  // Predicated region
  $region34: #{nnue_forward.1} parent=0 // pred_check
    _
  $region35: #{nnue_forward.1} parent=0 // pred_check_branch
    %753 = sbr.rel (0) target = $region37
  $region36: #{nnue_forward.1} parent=0 // pred_region
    _
  $region37: #{nnue_forward.1} parent=0 // pred_fallthru
    _

</llo_original>
